<compile_context>
chip_gen: v7x
topology: tpu7x:2x2x1
jax: 0.10.0
libtpu: 0.0.40
codegen_flags: <defaults>
</compile_context>

<pallas_src>
import math

import jax
import jax.numpy as jnp
from jax.experimental import pallas as pl
from jax.experimental.pallas import tpu as pltpu


def _drop_path_kernel(scale_ref, x_ref, o_ref):
    """scale_ref : VMEM f32 (tB, 1, 1)   per-sample scale (0 or 1/keep_prob)
       x_ref     : VMEM (tB, tS, L)      input tile
       o_ref     : VMEM (tB, tS, L)      output tile
    """
    o_ref[...] = (x_ref[...].astype(jnp.float32) * scale_ref[...]).astype(o_ref.dtype)


def drop_path(x, drop_prob: float = 0.0, training: bool = False, key=None):
    if drop_prob is None or drop_prob == 0.0 or not training:
        return x
    if key is None:
        # Reusing a fixed mask across layers/steps defeats stochastic depth.
        raise ValueError("drop_path: a PRNG `key` is required when training "
                         "with drop_prob > 0.")
    keep_prob = 1.0 - float(drop_prob)

    B = x.shape[0]
    M = int(math.prod(x.shape[1:])) if x.ndim > 1 else 1

    # --- per-sample scale (0.0 or 1/keep_prob), hoisted out of the kernel ---
    u = jax.random.uniform(key, (B,), dtype=jnp.float32)
    # floor(keep_prob + U[0,1)) == 1 with prob keep_prob, else 0 (ref formula)
    mask = jnp.floor(jnp.float32(keep_prob) + u)
    scale = (mask / jnp.float32(keep_prob)).reshape(B, 1, 1)

    # --- lane-dense layout: pad flattened sample to a multiple of 128 --------
    L = 128
    M_pad = ((M + L - 1) // L) * L
    xf = x.reshape(B, M)
    if M_pad != M:
        xf = jnp.pad(xf, ((0, 0), (0, M_pad - M)))
    S = M_pad // L
    xr = xf.reshape(B, S, L)

    # --- tiling: ~4 MiB blocks, sublane-pack aligned, batch-folded -----------
    itemsize = jnp.dtype(x.dtype).itemsize
    sub = {1: 32, 2: 16}.get(itemsize, 8)          # native sublane packing
    target_bytes = 4 << 20                          # ~4 MiB data block
    row_bytes = L * itemsize
    target_rows = max(sub, target_bytes // row_bytes)

    if S <= target_rows:
        tS = S                                      # full extent (always legal)
    else:
        tS = max(sub, (target_rows // sub) * sub)

    tile_bytes = tS * L * itemsize
    tB = max(1, min(B, target_bytes // max(tile_bytes, 1)))

    # On large inputs keep >=4 grid steps so v7x's 2 TensorCores share the work.
    total_bytes = B * S * L * itemsize
    if total_bytes >= 8 * (1 << 20):
        while pl.cdiv(B, tB) * pl.cdiv(S, tS) < 4:
            if tS >= 2 * sub:
                tS = max(sub, ((tS // 2) // sub) * sub)
            elif tB > 1:
                tB = (tB + 1) // 2
            else:
                break

    grid = (pl.cdiv(B, tB), pl.cdiv(S, tS))

    out = pl.pallas_call(
        _drop_path_kernel,
        out_shape=jax.ShapeDtypeStruct((B, S, L), x.dtype),
        grid=grid,
        in_specs=[
            pl.BlockSpec((tB, 1, 1), lambda bi, si: (bi, 0, 0)),     # scale
            pl.BlockSpec((tB, tS, L), lambda bi, si: (bi, si, 0)),   # x
        ],
        out_specs=pl.BlockSpec((tB, tS, L), lambda bi, si: (bi, si, 0)),
        compiler_params=pltpu.CompilerParams(
            dimension_semantics=("parallel", "parallel"),
            vmem_limit_bytes=32 * 1024 * 1024,
        ),
    )(scale, xr)

    out = out.reshape(B, M_pad)
    if M_pad != M:
        out = out[:, :M]
    return out.reshape(x.shape)


class DropPath:
    """JAX/Pallas counterpart of the PyTorch DropPath module."""

    def __init__(self, drop_prob=None):
        self.drop_prob = drop_prob
        self.training = True  # nn.Module default

    def __call__(self, x, key=None):
        return drop_path(x, self.drop_prob, self.training, key=key)


if __name__ == "__main__":
    key = jax.random.PRNGKey(0)
    kx, kmask = jax.random.split(key)
    B, N, D = 2, 8, 32
    x = jax.random.normal(kx, (B, N, D), dtype=jnp.float32)

    drop_prob = 0.1
    keep_prob = 1.0 - drop_prob
    mod = DropPath(drop_prob)

    # --- eval path: identity (no kernel) ---
    mod.training = False
    y_eval = jax.block_until_ready(mod(x))
    assert jnp.array_equal(y_eval, x), "eval path must be identity"

    # --- training path: Pallas kernel ---
    mod.training = True
    y = jax.block_until_ready(mod(x, key=kmask))
    assert y.shape == x.shape and y.dtype == x.dtype
    for b in range(B):
        dropped = bool(jnp.allclose(y[b], 0.0, atol=1e-6))
        kept = bool(jnp.allclose(y[b], x[b] / keep_prob, atol=1e-5, rtol=1e-5))
        assert dropped or kept, f"batch {b}: invalid drop-path output"

    # --- also exercise the M % 128 != 0 pad path ---
    x2 = jax.random.normal(kx, (3, 5, 7), dtype=jnp.float32)
    kp2 = 0.7
    y2 = jax.block_until_ready(drop_path(x2, 1.0 - kp2, True, key=kmask))
    assert y2.shape == x2.shape and y2.dtype == x2.dtype
    for b in range(3):
        dropped = bool(jnp.allclose(y2[b], 0.0, atol=1e-6))
        kept = bool(jnp.allclose(y2[b], x2[b] / kp2, atol=1e-5, rtol=1e-5))
        assert dropped or kept, f"pad-path batch {b}: invalid drop-path output"

    print("KERNEL_OK")
</pallas_src>

<mosaic_0001>
module attributes {stable_mosaic.version = 11 : i64} {
  func.func @_drop_path_kernel(%arg0: i32, %arg1: i32, %arg2: memref<2x1x1xf32, #tpu.memory_space<vmem>>, %arg3: memref<2x2x128xf32, #tpu.memory_space<vmem>>, %arg4: memref<2x2x128xf32, #tpu.memory_space<vmem>>) attributes {dimension_semantics = [#tpu.dimension_semantics<parallel>, #tpu.dimension_semantics<parallel>], iteration_bounds = array<i64: 1, 1>, scalar_prefetch = 0 : i64, scratch_operands = 0 : i64, tpu.core_type = #tpu.core_type<tc>, window_params = [{transform_indices = @transform_0, window_bounds = array<i64: 2, 1, 1>}, {transform_indices = @transform_1, window_bounds = array<i64: 2, 2, 128>}, {transform_indices = @transform_2, window_bounds = array<i64: 2, 2, 128>}]} {
    %c0 = arith.constant 0 : index
    %c0_0 = arith.constant 0 : index
    %c0_1 = arith.constant 0 : index
    %0 = vector.load %arg3[%c0, %c0_0, %c0_1] : memref<2x2x128xf32, #tpu.memory_space<vmem>>, vector<2x2x128xf32>
    %c0_2 = arith.constant 0 : index
    %c0_3 = arith.constant 0 : index
    %c0_4 = arith.constant 0 : index
    %1 = vector.load %arg2[%c0_2, %c0_3, %c0_4] : memref<2x1x1xf32, #tpu.memory_space<vmem>>, vector<2x1x1xf32>
    %2 = vector.broadcast %1 : vector<2x1x1xf32> to vector<2x2x128xf32>
    %3 = arith.mulf %0, %2 : vector<2x2x128xf32>
    %c0_5 = arith.constant 0 : index
    %c0_6 = arith.constant 0 : index
    %c0_7 = arith.constant 0 : index
    %4 = vector.load %arg4[%c0_5, %c0_6, %c0_7] : memref<2x2x128xf32, #tpu.memory_space<vmem>>, vector<2x2x128xf32>
    tpu.vector_store %arg4[%c0_5, %c0_6, %c0_7], %3 {strides = array<i32>} : memref<2x2x128xf32, #tpu.memory_space<vmem>>, vector<2x2x128xf32>,
    return
  }
  func.func @transform_0(%arg0: i32, %arg1: i32) -> (i32, i32, i32) {
    %c0_i32 = arith.constant 0 : i32
    %c0_i32_0 = arith.constant 0 : i32
    %c0_i32_1 = arith.constant 0 : i32
    return %arg0, %c0_i32, %c0_i32_0 : i32, i32, i32
  }
  func.func @transform_1(%arg0: i32, %arg1: i32) -> (i32, i32, i32) {
    %c0_i32 = arith.constant 0 : i32
    %c0_i32_0 = arith.constant 0 : i32
    return %arg0, %arg1, %c0_i32 : i32, i32, i32
  }
  func.func @transform_2(%arg0: i32, %arg1: i32) -> (i32, i32, i32) {
    %c0_i32 = arith.constant 0 : i32
    %c0_i32_0 = arith.constant 0 : i32
    return %arg0, %arg1, %c0_i32 : i32, i32, i32
  }
}

</mosaic_0001>

<llo_original>
// kernel: tpu_custom_call.1
$region0: #{tpu_custom_call.1}
  #allocation0 [shape = 'u32[]', space=smem, size = 0x4, offset = 0x4, fixed_abs, tag = 'smem constant byte address 0x4 - core index']
  #allocation1 [shape = 'u32[144,128]{1,0:T(1,128)}', space=vmem, size = 0x12000, scoped, tag = 'internal scratch']
  %s0 = inlined_call_operand.vmem [shape: f32[2,1,1], index: 0, kind: input, shape index: {}]
  %s1 = inlined_call_operand.vmem [shape: f32[2,2,128], index: 1, kind: input, shape index: {}]
  %s2 = inlined_call_operand.hbm [shape: f32[2,2,128], index: 2, kind: output, shape index: {}]
  %s3 = sld [smem:[#allocation0]]
  $region18: #{tpu_custom_call.1} parent=0
    _
  %s5 = ssub.s32 1, %s3
  %s6 = scalar_select 0, %s5, %s3
  $region1: #{tpu_custom_call.1} parent=0
    #allocation2 [shape = 'u8[2048]{0}', space=vmem, size = 0x800, scoped, tag = 'output window, operand 0, single buffered']
    #allocation3 [shape = 's32[1]{0}', space=sflag, size = 0x4, scoped, tag = 'scoped memory for tpu_custom_call.1']
    %7 = vsyncpa [#allocation3], 0
    // Predicated region
    $region2: #{tpu_custom_call.1} parent=1 // pred_check
      _
    $region3: #{tpu_custom_call.1} parent=1 // pred_check_branch
      %9 = sbr.rel (0) target = $region5
    $region4: #{tpu_custom_call.1} parent=1 // pred_region
      _
    $region5: #{tpu_custom_call.1} parent=1 // pred_fallthru
      _
    // Predicated region
    $region6: #{tpu_custom_call.1} parent=1 // pred_check
      _
    $region7: #{tpu_custom_call.1} parent=1 // pred_check_branch
      %11 = sbr.rel (0) target = $region9
    $region8: #{tpu_custom_call.1} parent=1 // pred_region
      _
    $region9: #{tpu_custom_call.1} parent=1 // pred_fallthru
      _
    %v12 = vld [vmem:[%s1] sm:$0x3]
    %v13 = vld [vmem:[%s1 + $0x2] sm:$0x3]
    %v14 = vld [vmem:[%s0] sm:$0x1]
    %v15 = vld [vmem:[%s0 + $0x1] sm:$0x1]
    %v18 = vlaneseq
    %v19 = vshrl.u32 %v18, 7
    %v20 = vsub.s32 0, %v19
    %v21 = vrot.slane %v14, %v20
    %v22 = vlaneseq
    %v23 = vshrl.u32 %v22, 7
    %v24 = vsub.s32 0, %v23
    %v25 = vrot.slane %v15, %v24
    %26 = vset.pattern.permute.xlu0 0
    %27 = vperm.xlu0 %26, %v21
    %v28 = vpop.permute.xlu0 %27
    %30 = vset.pattern.permute.xlu0 0
    %31 = vperm.xlu0 %30, %v25
    %v32 = vpop.permute.xlu0 %31
    %v34 = vmul.f32 %v12, %v28
    %v35 = vmul.f32 %v13, %v32
    %36 = vst [vmem:[#allocation2] sm:$0x3] %v34
    %37 = vst [vmem:[#allocation2 + $0x2] sm:$0x3] %v35
    // Predicated region
    $region10: #{tpu_custom_call.1} parent=1 // pred_check
      _
    $region11: #{tpu_custom_call.1} parent=1 // pred_check_branch
      %39 = sbr.rel (0) target = $region13
    $region12: #{tpu_custom_call.1} parent=1 // pred_region
      %s41 = ssub.s32 64, 64
      %42 = vsyncadd [#allocation3], %s41
      %s43 = sshll.u32 [#allocation2], 4
      %s44 = int_to_ptr.vmem [resolvable:$true] %s43
      %49 = dma.vmem_to_hbm [thread:$0]  %s44, 64, %s2, [#allocation3], 32, 32, 2
    $region13: #{tpu_custom_call.1} parent=1 // pred_fallthru
      _
    // Predicated region
    $region14: #{tpu_custom_call.1} parent=1 // pred_check
      _
    $region15: #{tpu_custom_call.1} parent=1 // pred_check_branch
      %51 = sbr.rel (0) target = $region17
    $region16: #{tpu_custom_call.1} parent=1 // pred_region
      %52 = dma.done [#allocation3], 64
    $region17: #{tpu_custom_call.1} parent=1 // pred_fallthru
      _
    %53 = vsyncpa [#allocation3], 1

</llo_original>
